<compile_context>
chip_gen: v7x
topology: tpu7x:2x2x1
jax: 0.10.0
libtpu: 0.0.40
codegen_flags: <defaults>
</compile_context>

<pallas_src>
import jax
import jax.numpy as jnp
from jax import lax
from jax.experimental import pallas as pl
from jax.experimental.pallas import tpu as pltpu


def _rmsnorm_kernel(x_ref, g_ref, o_ref):
    # x_ref: (TB, C, TL)   g_ref: (1, C, 1)   o_ref: (TB, C, TL)
    x = x_ref[...]
    xf = x.astype(jnp.float32)

    # L2 norm over the channel axis, per (batch, position), accumulated in f32.
    sq_sum = jnp.sum(xf * xf, axis=1, keepdims=True)            # (TB, 1, TL)

    # rsqrt on the EUP; clamping sq_sum at eps^2 == clamping ||x|| at eps.
    inv = lax.rsqrt(jnp.maximum(sq_sum, jnp.float32(1e-24)))    # (TB, 1, TL)

    # Fold sqrt(C) into the small broadcast factor (not a per-element mul),
    # then drop to the input dtype so bf16 blocks stay packed on the store
    # path (precision of the factor in bf16 is fine for RMSNorm).
    scale = jnp.float32(float(x_ref.shape[1]) ** 0.5)
    f = (inv * scale).astype(x.dtype)                           # (TB, 1, TL)
    g = g_ref[...].astype(x.dtype)                              # (1,  C, 1)

    # 2 broadcast multiplies per element, native dtype.
    o_ref[...] = ((x * f) * g).astype(o_ref.dtype)


def _round_up(n, m):
    return ((n + m - 1) // m) * m


def _budgets():
    """(block_budget_bytes, vmem_limit_bytes), generation-aware."""
    vmem_cap = 128 * 1024 * 1024
    try:
        vmem_cap = int(pltpu.get_tpu_info().vmem_capacity_bytes)
    except Exception:
        pass
    if vmem_cap <= 64 * 1024 * 1024:
        # v7x-class: 64 MiB physical VMEM per TensorCore.
        return 5 * 1024 * 1024, 40 * 1024 * 1024
    # v5e / v6e: 128 MiB physical VMEM.
    return 4 * 1024 * 1024, 64 * 1024 * 1024


def rms_norm(x, g):
    """x: (B, C, L) float array; g: (1, C, 1) gain parameter."""
    B, C, L = x.shape
    assert g.shape == (1, C, 1)
    itemsize = jnp.dtype(x.dtype).itemsize
    block_budget, vmem_limit = _budgets()

    # ---- pick tile sizes (mem-bound kernel: biggest block that fits) ----
    # Lane floor: keep strided DMA rows >= ~2 KiB contiguous when possible,
    # but never let the floor alone blow the block budget for huge C.
    lanes_floor = 512
    while lanes_floor > 128 and C * lanes_floor * itemsize > 2 * block_budget:
        lanes_floor //= 2
    lanes_cap = max(lanes_floor,
                    (block_budget // max(C * itemsize, 1) // 128) * 128)
    tile_l = min(_round_up(L, 128), 4096, lanes_cap)

    # Batch tile: as large as the budget allows.
    tile_b = max(1, min(B, block_budget // max(C * tile_l * itemsize, 1)))

    # Keep the pipeline fed: aim for >= 8 grid steps (>= 4 per TensorCore on
    # v7x) whenever the tensor is large enough; otherwise stop at the floors.
    min_steps = 8
    while True:
        n_b = pl.cdiv(B, tile_b)
        n_l = pl.cdiv(L, tile_l)
        if n_b * n_l >= min_steps:
            break
        if tile_b > 1:
            tile_b = (tile_b + 1) // 2
        elif tile_l > 256:
            tile_l = max(256, _round_up(tile_l // 2, 128))
        else:
            break

    # ---- cost estimate: real (un-padded) traffic ----
    cost = pl.CostEstimate(
        flops=4 * B * C * L,
        transcendentals=B * L,
        bytes_accessed=2 * B * C * L * itemsize
        + C * jnp.dtype(g.dtype).itemsize,
    )

    # TODO(synk): if an xprof trace still shows exposed DMA at step
    # boundaries on v7x, add pipeline_mode=pl.Buffered(3) to the x/out specs
    # (only if the extra block still fits the scoped VMEM limit).
    out = pl.pallas_call(
        _rmsnorm_kernel,
        out_shape=jax.ShapeDtypeStruct((B, C, L), x.dtype),
        grid_spec=pltpu.PrefetchScalarGridSpec(
            num_scalar_prefetch=0,
            grid=(n_b, n_l),
            in_specs=[
                pl.BlockSpec((tile_b, C, tile_l), lambda b, l: (b, 0, l)),
                pl.BlockSpec((1, C, 1), lambda b, l: (0, 0, 0)),
            ],
            out_specs=pl.BlockSpec((tile_b, C, tile_l), lambda b, l: (b, 0, l)),
        ),
        compiler_params=pltpu.CompilerParams(
            dimension_semantics=("parallel", "parallel"),
            vmem_limit_bytes=vmem_limit,
        ),
        cost_estimate=cost,
    )(x, g)
    return out


def rms_norm_ref(x, g):
    xf = x.astype(jnp.float32)
    norm = jnp.sqrt(jnp.sum(xf * xf, axis=1, keepdims=True))
    return (xf / jnp.maximum(norm, 1e-12) * g * (x.shape[1] ** 0.5)).astype(x.dtype)


if __name__ == "__main__":
    key = jax.random.PRNGKey(0)

    # Ragged-L case (exercises the masked edge block — no pad/slice path).
    B, C, L = 2, 8, 200
    x = jax.random.normal(key, (B, C, L), dtype=jnp.float32)
    g = jnp.ones((1, C, 1), dtype=jnp.float32)  # nn.Parameter(torch.ones(1, dim, 1))
    out = rms_norm(x, g)
    jax.block_until_ready(out)
    ref = rms_norm_ref(x, g)
    assert out.shape == (B, C, L)
    assert jnp.allclose(out, ref, atol=1e-5, rtol=1e-5)

    # Aligned-L case.
    B2, C2, L2 = 2, 8, 256
    x2 = jax.random.normal(jax.random.PRNGKey(1), (B2, C2, L2), dtype=jnp.float32)
    g2 = jnp.ones((1, C2, 1), dtype=jnp.float32)
    out2 = rms_norm(x2, g2)
    jax.block_until_ready(out2)
    ref2 = rms_norm_ref(x2, g2)
    assert out2.shape == (B2, C2, L2)
    assert jnp.allclose(out2, ref2, atol=1e-5, rtol=1e-5)

    print("KERNEL_OK")
</pallas_src>

<mosaic_0001>
module attributes {stable_mosaic.version = 11 : i64} {
  func.func @_rmsnorm_kernel(%arg0: i32, %arg1: i32, %arg2: memref<1x8x256xf32, #tpu.memory_space<vmem>>, %arg3: memref<1x8x1xf32, #tpu.memory_space<vmem>>, %arg4: memref<1x8x256xf32, #tpu.memory_space<vmem>>) attributes {dimension_semantics = [#tpu.dimension_semantics<parallel>, #tpu.dimension_semantics<parallel>], iteration_bounds = array<i64: 2, 1>, scalar_prefetch = 0 : i64, scratch_operands = 0 : i64, tpu.core_type = #tpu.core_type<tc>, window_params = [{transform_indices = @transform_0, window_bounds = array<i64: 1, 8, 256>}, {pipeline_mode = #tpu.pipeline_mode<synchronous>, transform_indices = @transform_1, window_bounds = array<i64: 1, 8, 1>}, {transform_indices = @transform_2, window_bounds = array<i64: 1, 8, 256>}]} {
    %c0 = arith.constant 0 : index
    %c0_0 = arith.constant 0 : index
    %c0_1 = arith.constant 0 : index
    %0 = vector.load %arg2[%c0, %c0_0, %c0_1] : memref<1x8x256xf32, #tpu.memory_space<vmem>>, vector<1x8x256xf32>
    %1 = arith.mulf %0, %0 : vector<1x8x256xf32>
    %cst = arith.constant dense<0.000000e+00> : vector<1x256xf32>
    %2 = vector.multi_reduction <add>, %1, %cst [1] : vector<1x8x256xf32> to vector<1x256xf32>
    %3 = vector.shape_cast %2 : vector<1x256xf32> to vector<1x1x256xf32>
    %cst_2 = arith.constant 1.000000e-24 : f32
    %4 = vector.broadcast %cst_2 : f32 to vector<1x1x256xf32>
    %5 = arith.maximumf %3, %4 : vector<1x1x256xf32>
    %6 = math.rsqrt %5 : vector<1x1x256xf32>
    %cst_3 = arith.constant 2.82842708 : f32
    %7 = vector.broadcast %cst_3 : f32 to vector<1x1x256xf32>
    %8 = arith.mulf %6, %7 : vector<1x1x256xf32>
    %c0_4 = arith.constant 0 : index
    %c0_5 = arith.constant 0 : index
    %c0_6 = arith.constant 0 : index
    %9 = vector.load %arg3[%c0_4, %c0_5, %c0_6] : memref<1x8x1xf32, #tpu.memory_space<vmem>>, vector<1x8x1xf32>
    %10 = vector.broadcast %8 : vector<1x1x256xf32> to vector<1x8x256xf32>
    %11 = arith.mulf %0, %10 : vector<1x8x256xf32>
    %12 = vector.broadcast %9 : vector<1x8x1xf32> to vector<1x8x256xf32>
    %13 = arith.mulf %11, %12 : vector<1x8x256xf32>
    %c0_7 = arith.constant 0 : index
    %c0_8 = arith.constant 0 : index
    %c0_9 = arith.constant 0 : index
    %14 = vector.load %arg4[%c0_7, %c0_8, %c0_9] : memref<1x8x256xf32, #tpu.memory_space<vmem>>, vector<1x8x256xf32>
    tpu.vector_store %arg4[%c0_7, %c0_8, %c0_9], %13 {strides = array<i32>} : memref<1x8x256xf32, #tpu.memory_space<vmem>>, vector<1x8x256xf32>,
    return
  }
  func.func @transform_0(%arg0: i32, %arg1: i32) -> (i32, i32, i32) {
    %c0_i32 = arith.constant 0 : i32
    %c0_i32_0 = arith.constant 0 : i32
    return %arg0, %c0_i32, %arg1 : i32, i32, i32
  }
  func.func @transform_1(%arg0: i32, %arg1: i32) -> (i32, i32, i32) {
    %c0_i32 = arith.constant 0 : i32
    %c0_i32_0 = arith.constant 0 : i32
    %c0_i32_1 = arith.constant 0 : i32
    %c0_i32_2 = arith.constant 0 : i32
    return %c0_i32, %c0_i32_0, %c0_i32_1 : i32, i32, i32
  }
  func.func @transform_2(%arg0: i32, %arg1: i32) -> (i32, i32, i32) {
    %c0_i32 = arith.constant 0 : i32
    %c0_i32_0 = arith.constant 0 : i32
    return %arg0, %c0_i32, %arg1 : i32, i32, i32
  }
}

</mosaic_0001>

<llo_original>
// kernel: tpu_custom_call.1
$region0: #{tpu_custom_call.1}
  #allocation0 [shape = 'u32[]', space=smem, size = 0x4, offset = 0x4, fixed_abs, tag = 'smem constant byte address 0x4 - core index']
  #allocation1 [shape = 'u32[144,128]{1,0:T(1,128)}', space=vmem, size = 0x12000, scoped, tag = 'internal scratch']
  %s0 = inlined_call_operand.hbm [shape: f32[2,8,200], index: 0, kind: input, shape index: {}]
  %s1 = inlined_call_operand.hbm [shape: f32[1,8,1], index: 1, kind: input, shape index: {}]
  %s2 = inlined_call_operand.hbm [shape: f32[2,8,200], index: 2, kind: output, shape index: {}]
  %s3 = sld [smem:[#allocation0]]
  $region49: #{tpu_custom_call.1} parent=0
    _
  %s5 = ssub.s32 1, %s3
  %s6 = scalar_select 0, %s5, %s3
  $region1: #{tpu_custom_call.1} parent=0
    #allocation2 [shape = 'u8[16384]{0}', space=vmem, size = 0x4000, scoped, tag = 'input window, operand 0']
    #allocation3 [shape = 's32[2]{0}', space=sflag, size = 0x8, scoped, tag = 'scoped memory for tpu_custom_call.1']
    #allocation4 [shape = 's32[2]{0}', space=sflag, size = 0x8, scoped, tag = 'scoped memory for tpu_custom_call.1']
    #allocation5 [shape = 'u8[4096]{0}', space=vmem, size = 0x1000, scoped, tag = 'input window, operand 1, single buffered']
    #allocation6 [shape = 's32[1]{0}', space=sflag, size = 0x4, scoped, tag = 'scoped memory for tpu_custom_call.1']
    #allocation7 [shape = 'u8[16384]{0}', space=vmem, size = 0x4000, scoped, tag = 'output window, operand 0']
    %7 = vsyncpa [#allocation3], 0
    %s8 = scalar_lea.sflag [#allocation3], 1
    %9 = vsyncpa %s8, 0
    %10 = vsyncpa [#allocation6], 0
    %11 = vsyncpa [#allocation4], 0
    %s12 = scalar_lea.sflag [#allocation4], 1
    %13 = vsyncpa %s12, 0
    loop: start=0, step=1, limit=4
    $region2: #{tpu_custom_call.1} parent=1 // loop_pre_header
      _
    $region3: #{tpu_custom_call.1} parent=1 // loop_header
      %s15 = sphi 0, %s19
      %p16 = scmp.ge.s32.totalorder %s15, 4
      %s22 = sphi 0, %s34
      %s23 = sphi 0, %s30
      %s24 = sphi 0, %s22
      %s25 = sphi 0, %s23
      %s26 = sphi 0, %s24
      %s27 = sphi 0, %s25
      %s39 = sphi 0, %s41
      %s42 = sphi 0, %s39
      %s43 = sphi 0, %s42
      %s59 = sphi 0, %s43
      %s63 = sphi 0, %s63
      %s65 = sphi 0, %s63
      %s66 = sphi 0, %s65
      %s80 = sphi 0, %s66
      %s88 = sphi 0, %s90
      %s91 = sphi 0, %s88
      %s92 = sphi 0, %s91
      %s108 = sphi 0, %s92
    $region4: #{tpu_custom_call.1} parent=1 // loop_header_branch
      %18 = sbr.rel (%p16) target = $region8
    $region5: #{tpu_custom_call.1} parent=1 // loop_body
      %s20 = ssub.s32 %s15, 1
      %s21 = ssub.s32 %s15, 2
      %s28 = sadd.s32 1, %s23
      %p29 = scmp.ge.s32.totalorder %s28, 1
      %s30 = scalar_select %p29, 0, %s28
      %s31 = sadd.s32 1, %s22
      %s32 = scalar_select %p29, %s31, %s22
      %p33 = scmp.ge.s32.totalorder %s32, 2
      %s34 = scalar_select %p33, 0, %s32
      %s35 = ssub.s32 %s22, %s34
      %s36 = ssub.s32 %s23, %s30
      %s37 = sor.u32 %s35, %s36
      %p38 = scmp.eq.s32.totalorder %s37, 0
      %s40 = sadd.s32 %s39, 1
      %s41 = scalar_select %p38, %s39, %s40
      %p44 = pneg %p38
      %p45 = scmp.eq.s32.totalorder %s15, 1
      %p46 = por %p44, %p45
      %p47 = scmp.ne.s32.totalorder %s39, %s42
      %p48 = scmp.eq.s32.totalorder %s15, 0
      %p49 = por %p47, %p48
      %p50 = scmp.ne.s32.totalorder %s39, %s42
      %p51 = scmp.eq.s32.totalorder %s20, 1
      %p52 = por %p50, %p51
      %p53 = scmp.ne.s32.totalorder %s42, %s43
      %p54 = scmp.eq.s32.totalorder %s20, 0
      %p55 = por %p53, %p54
      %p56 = scmp.ne.s32.totalorder %s42, %s43
      %p57 = scmp.eq.s32.totalorder %s21, 1
      %p58 = por %p56, %p57
      %p60 = scmp.ne.s32.totalorder %s43, %s59
      %p61 = scmp.eq.s32.totalorder %s21, 0
      %p62 = por %p60, %p61
      %s64 = sadd.s32 %s63, 1
      %p67 = scmp.eq.s32.totalorder %s15, 1
      %p68 = scmp.ne.s32.totalorder %s63, %s65
      %p69 = scmp.eq.s32.totalorder %s15, 0
      %p70 = por %p68, %p69
      %p71 = scmp.ne.s32.totalorder %s63, %s65
      %p72 = scmp.eq.s32.totalorder %s20, 1
      %p73 = por %p71, %p72
      %p74 = scmp.ne.s32.totalorder %s65, %s66
      %p75 = scmp.eq.s32.totalorder %s20, 0
      %p76 = por %p74, %p75
      %p77 = scmp.ne.s32.totalorder %s65, %s66
      %p78 = scmp.eq.s32.totalorder %s21, 1
      %p79 = por %p77, %p78
      %p81 = scmp.ne.s32.totalorder %s66, %s80
      %p82 = scmp.eq.s32.totalorder %s21, 0
      %p83 = por %p81, %p82
      %s84 = ssub.s32 %s22, %s34
      %s85 = ssub.s32 %s23, %s30
      %s86 = sor.u32 %s84, %s85
      %p87 = scmp.eq.s32.totalorder %s86, 0
      %s89 = sadd.s32 %s88, 1
      %s90 = scalar_select %p87, %s88, %s89
      %p93 = pneg %p87
      %p94 = scmp.eq.s32.totalorder %s15, 1
      %p95 = por %p93, %p94
      %p96 = scmp.ne.s32.totalorder %s88, %s91
      %p97 = scmp.eq.s32.totalorder %s15, 0
      %p98 = por %p96, %p97
      %p99 = scmp.ne.s32.totalorder %s88, %s91
      %p100 = scmp.eq.s32.totalorder %s20, 1
      %p101 = por %p99, %p100
      %p102 = scmp.ne.s32.totalorder %s91, %s92
      %p103 = scmp.eq.s32.totalorder %s20, 0
      %p104 = por %p102, %p103
      %p105 = scmp.ne.s32.totalorder %s91, %s92
      %p106 = scmp.eq.s32.totalorder %s21, 1
      %p107 = por %p105, %p106
      %p109 = scmp.ne.s32.totalorder %s92, %s108
      %p110 = scmp.eq.s32.totalorder %s21, 0
      %p111 = por %p109, %p110
      %p112 = scmp.le.s32.totalorder 1, %s15
      %p113 = scmp.lt.s32.totalorder %s15, 3
      %p114 = pnand %p112, %p113
      %p115 = pneg %p114
      // Predicated region
      $region9: #{tpu_custom_call.1} parent=5 // pred_check
        _
      $region10: #{tpu_custom_call.1} parent=5 // pred_check_branch
        %117 = sbr.rel (%p114) target = $region12
      $region11: #{tpu_custom_call.1} parent=5 // pred_region
        %s118 = ssub.s32 %s15, 1
        // Predicated region
        $region13: #{tpu_custom_call.1} parent=11 // pred_check
          %p119 = pneg %p76
        $region14: #{tpu_custom_call.1} parent=11 // pred_check_branch
          %121 = sbr.rel (%p119) target = $region16
        $region15: #{tpu_custom_call.1} parent=11 // pred_region
          %s123 = ssub.s32 128, 128
          %124 = vsyncadd [#allocation6], %s123
          %s126 = sshll.u32 [#allocation5], 4
          %s127 = int_to_ptr.vmem [resolvable:$true] %s126
          %129 = dma.hbm_to_vmem [thread:$0]  %s1, 128, %s127, [#allocation6]
        $region16: #{tpu_custom_call.1} parent=11 // pred_fallthru
          _
      $region12: #{tpu_custom_call.1} parent=5 // pred_fallthru
        _
      %p130 = scmp.lt.s32.totalorder %s15, 2
      // Predicated region
      $region17: #{tpu_custom_call.1} parent=5 // pred_check
        %p131 = pneg %p130
      $region18: #{tpu_custom_call.1} parent=5 // pred_check_branch
        %133 = sbr.rel (%p131) target = $region20
      $region19: #{tpu_custom_call.1} parent=5 // pred_region
        // Predicated region
        $region21: #{tpu_custom_call.1} parent=19 // pred_check
          %p134 = pneg %p49
        $region22: #{tpu_custom_call.1} parent=19 // pred_check_branch
          %136 = sbr.rel (%p134) target = $region24
        $region23: #{tpu_custom_call.1} parent=19 // pred_region
          %s137 = sand.u32 %s39, 1
          %s138 = scalar_lea.sflag [#allocation3], %s137
          %s139 = sand.u32 %s39, 1
          %s140 = smul.addr %s139, 16
          %s141 = scalar_lea.vmem [#allocation2], %s140
          %s142 = smul.u32 2, %s23
          %s144 = ssub.s32 256, 256
          %145 = vsyncadd %s138, %s144
          %s146 = smul.addr %s22, 2
          %s147 = sadd.s32 %s142, %s146
          %s148 = smul.addr %s147, 128
          %s149 = scalar_lea.hbm %s0, %s148
          %s151 = sshll.u32 %s141, 4
          %s152 = int_to_ptr.vmem [resolvable:$true] %s151
          %154 = dma.hbm_to_vmem [thread:$0]  %s149, 256, %s152, %s138
        $region24: #{tpu_custom_call.1} parent=19 // pred_fallthru
          _
      $region20: #{tpu_custom_call.1} parent=5 // pred_fallthru
        _
      %p155 = scmp.le.s32.totalorder 1, %s15
      %p156 = scmp.lt.s32.totalorder %s15, 3
      %p157 = pnand %p155, %p156
      %p158 = pneg %p157
      // Predicated region
      $region25: #{tpu_custom_call.1} parent=5 // pred_check
        _
      $region26: #{tpu_custom_call.1} parent=5 // pred_check_branch
        %160 = sbr.rel (%p157) target = $region28
      $region27: #{tpu_custom_call.1} parent=5 // pred_region
        %s161 = ssub.s32 %s15, 1
        %s162 = sand.u32 %s42, 1
        %s163 = scalar_lea.sflag [#allocation3], %s162
        %s164 = sand.u32 %s42, 1
        %s165 = smul.addr %s164, 16
        %s166 = scalar_lea.vmem [#allocation2], %s165
        // Predicated region
        $region29: #{tpu_custom_call.1} parent=27 // pred_check
          %p167 = pneg %p55
        $region30: #{tpu_custom_call.1} parent=27 // pred_check_branch
          %169 = sbr.rel (%p167) target = $region32
        $region31: #{tpu_custom_call.1} parent=27 // pred_region
          %170 = dma.done %s163, 256
        $region32: #{tpu_custom_call.1} parent=27 // pred_fallthru
          _
        // Predicated region
        $region33: #{tpu_custom_call.1} parent=27 // pred_check
          %p171 = pneg %p76
        $region34: #{tpu_custom_call.1} parent=27 // pred_check_branch
          %173 = sbr.rel (%p171) target = $region36
        $region35: #{tpu_custom_call.1} parent=27 // pred_region
          %174 = dma.done [#allocation6], 128
        $region36: #{tpu_custom_call.1} parent=27 // pred_fallthru
          _
        %s175 = sand.u32 %s42, 1
        %s176 = scalar_lea.sflag [#allocation3], %s175
        %s177 = sand.u32 %s42, 1
        %s178 = smul.addr %s177, 16
        %s179 = scalar_lea.vmem [#allocation2], %s178
        %p180 = pneg %p55
        %p181 = pneg %p52
        %p182 = pneg %p76
        %p183 = pneg %p73
        %p184 = pneg %p104
        %p185 = pneg %p101
        %s186 = sand.u32 %s91, 1
        %s187 = scalar_lea.sflag [#allocation4], %s186
        %s188 = sand.u32 %s91, 1
        %s189 = smul.addr %s188, 16
        %s190 = scalar_lea.vmem [#allocation7], %s189
        %s191 = smul.u32 2, %s25
        %s192 = smul.u32 2, %s25
        %v193 = vld [vmem:[%s166] sm:$0xff]
        %v194 = vld [vmem:[%s166 + $0x8] sm:$0xff]
        %v195 = vmul.f32 %v193, %v193
        %v196 = vmul.f32 %v194, %v194
        %v197 = vrot.slane %v195, 4
        %v198 = vadd.f32 %v195, %v197
        %v199 = vrot.slane %v198, 2
        %v200 = vadd.f32 %v198, %v199
        %v201 = vrot.slane %v200, 1
        %v202 = vadd.f32 %v200, %v201
        %v203 = vrot.slane %v196, 4
        %v204 = vadd.f32 %v196, %v203
        %v205 = vrot.slane %v204, 2
        %v206 = vadd.f32 %v204, %v205
        %v207 = vrot.slane %v206, 1
        %v208 = vadd.f32 %v206, %v207
        %v209 = vmax.f32 %v202, 1e-24
        %v210 = vmax.f32 %v208, 1e-24
        %v211 = vrsqrt.pop %v209
        %v212 = vrsqrt.pop %v210
        %v213 = vmul.f32 %v211, 2.828427
        %v214 = vmul.f32 %v212, 2.828427
        %v215 = vld [vmem:[#allocation5] sm:$0xff]
        %v216 = vmul.f32 %v193, %v213
        %v217 = vmul.f32 %v194, %v214
        %219 = vset.pattern.permute.xlu0 0
        %220 = vperm.xlu0 %219, %v215
        %v221 = vpop.permute.xlu0 %220
        %v223 = vmul.f32 %v216, %v221
        %v224 = vmul.f32 %v217, %v221
        %225 = vst [vmem:[%s190] sm:$0xff] %v223
        %226 = vst [vmem:[%s190 + $0x8] sm:$0xff] %v224
        %s227 = sand.u32 %s91, 1
        %s228 = scalar_lea.sflag [#allocation4], %s227
        %s229 = sand.u32 %s91, 1
        %s230 = smul.addr %s229, 16
        %s231 = scalar_lea.vmem [#allocation7], %s230
        // Predicated region
        $region37: #{tpu_custom_call.1} parent=27 // pred_check
          %p232 = pneg %p101
        $region38: #{tpu_custom_call.1} parent=27 // pred_check_branch
          %234 = sbr.rel (%p232) target = $region40
        $region39: #{tpu_custom_call.1} parent=27 // pred_region
          %s235 = smul.u32 2, %s25
          %s237 = ssub.s32 256, 256
          %238 = vsyncadd %s228, %s237
          %s239 = smul.addr %s24, 2
          %s240 = sadd.s32 %s235, %s239
          %s241 = smul.addr %s240, 128
          %s242 = scalar_lea.hbm %s2, %s241
          %s244 = sshll.u32 %s231, 4
          %s245 = int_to_ptr.vmem [resolvable:$true] %s244
          %247 = dma.vmem_to_hbm [thread:$0]  %s245, 256, %s242, %s228
        $region40: #{tpu_custom_call.1} parent=27 // pred_fallthru
          _
      $region28: #{tpu_custom_call.1} parent=5 // pred_fallthru
        _
      %p248 = scmp.le.s32.totalorder 2, %s15
      // Predicated region
      $region41: #{tpu_custom_call.1} parent=5 // pred_check
        %p249 = pneg %p248
      $region42: #{tpu_custom_call.1} parent=5 // pred_check_branch
        %251 = sbr.rel (%p249) target = $region44
      $region43: #{tpu_custom_call.1} parent=5 // pred_region
        %s252 = ssub.s32 %s15, 2
        // Predicated region
        $region45: #{tpu_custom_call.1} parent=43 // pred_check
          %p253 = pneg %p107
        $region46: #{tpu_custom_call.1} parent=43 // pred_check_branch
          %255 = sbr.rel (%p253) target = $region48
        $region47: #{tpu_custom_call.1} parent=43 // pred_region
          %s256 = sand.u32 %s92, 1
          %s257 = scalar_lea.sflag [#allocation4], %s256
          %s258 = sand.u32 %s92, 1
          %s259 = smul.addr %s258, 16
          %s260 = scalar_lea.vmem [#allocation7], %s259
          %261 = dma.done %s257, 256
        $region48: #{tpu_custom_call.1} parent=43 // pred_fallthru
          _
      $region44: #{tpu_custom_call.1} parent=5 // pred_fallthru
        _
    $region6: #{tpu_custom_call.1} parent=1 // loop_footer
      %s19 = sadd.s32 1, %s15
    $region7: #{tpu_custom_call.1} parent=1 // loop_footer_branch
      %14 = sbr.rel target = $region3
    $region8: #{tpu_custom_call.1} parent=1 // loop_exit
      _
    %262 = vsyncpa [#allocation3], 1
    %s263 = scalar_lea.sflag [#allocation3], 1
    %264 = vsyncpa %s263, 1
    %265 = vsyncpa [#allocation6], 1
    %266 = vsyncpa [#allocation4], 1
    %s267 = scalar_lea.sflag [#allocation4], 1
    %268 = vsyncpa %s267, 1

</llo_original>
